<compile_context>
chip_gen: v5e
topology: v5e:2x2
jax: 0.10.0
libtpu: 0.0.40
codegen_flags: <defaults>
</compile_context>

<pallas_src>
import functools

import jax
import jax.numpy as jnp
import numpy as np
from jax.experimental import pallas as pl
from jax.experimental.pallas import tpu as pltpu


def _round_up(x, m):
    return (x + m - 1) // m * m


def _sublane_pack(dtype):
    # rows per packed sublane group: f32 -> 8, bf16 -> 16, int8/fp8 -> 32
    bits = jnp.dtype(dtype).itemsize * 8
    return 8 * max(1, 32 // bits)


def _vmem_limit_bytes():
    cap = 64 * 1024 * 1024
    try:
        info = pltpu.get_tpu_info()
        cap = int(getattr(info, "vmem_capacity_bytes", cap))
    except Exception:
        pass
    # ~25% headroom for compiler-internal scratch, semaphores, DMA descriptors.
    return (cap * 3) // 4


def _const_spec(shape):
    # Grid-invariant full block: fetched once, stays resident for the whole
    # grid.  Single-buffered (Buffered(1)) because its index_map is constant,
    # halving the resident-weight footprint vs. the default double buffer.
    idx = lambda i: (0, 0)
    try:
        return pl.BlockSpec(shape, idx, pipeline_mode=pl.Buffered(1))
    except TypeError:  # older jax without pipeline_mode kwarg
        return pl.BlockSpec(shape, idx)


def _lora_linear(x, wt_ref, bt_ref, at_ref, bias_ref):
    """y = x @ W^T + (x @ B^T) @ A^T + bias  (refs hold pre-transposed factors).

    wt_ref : (D_in, D_out)   = W^T
    bt_ref : (D_in, R_pad)   = B^T   (rank zero-padded to a 128-lane multiple)
    at_ref : (R_pad, D_out)  = A^T
    bias   : (1, D_out)
    All matmuls are transpose-free and accumulate in f32 on the MXU.
    """
    acc = jnp.dot(x, wt_ref[...], preferred_element_type=jnp.float32)
    xb = jnp.dot(x, bt_ref[...], preferred_element_type=jnp.float32)
    # Deliberate precision choice: the LoRA intermediate is cast back to the
    # activation storage dtype (bf16 when running bf16) before the second
    # low-rank matmul; accumulation stays f32.
    acc = acc + jnp.dot(xb.astype(x.dtype), at_ref[...],
                        preferred_element_type=jnp.float32)
    return acc + bias_ref[...].astype(jnp.float32)


def lora_mlp_kernel(x_ref,
                    wg_ref, bg_ref, ag_ref, biasg_ref,
                    wd_ref, bd_ref, ad_ref, biasd_ref,
                    wu_ref, bu_ref, au_ref, biasu_ref,
                    o_ref):
    cdt = x_ref.dtype  # activation storage dtype (f32 or bf16)
    h = x_ref[...]
    h = _lora_linear(h, wg_ref, bg_ref, ag_ref, biasg_ref).astype(cdt)  # gate_proj
    h = _lora_linear(h, wd_ref, bd_ref, ad_ref, biasd_ref).astype(cdt)  # down_proj
    h = _lora_linear(h, wu_ref, bu_ref, au_ref, biasu_ref)              # up_proj (f32)
    o_ref[...] = h.astype(o_ref.dtype)


@functools.partial(jax.jit, static_argnames=("tile_m",))
def lora_mlp_forward(x, params, tile_m=256):
    """x: (batch, seq, D).  params: dict name -> (W (D,D), A (D,R), B (R,D), bias (D,)).

    tile_m guidance: 256 on v6e/v7x (2x256^2 MXU), 128 is enough on v5e
    (4x128^2 MXU); it is clamped/adapted to the actual row count below.
    """
    batch, seq, D = x.shape
    M = batch * seq

    # --- row tiling: sublane-pack aligned, minimize ragged-M padding waste ---
    pack = _sublane_pack(x.dtype)
    tile_m = _round_up(tile_m, pack)
    if M <= tile_m:
        tm = _round_up(M, pack)
    else:
        candidates = sorted({tile_m, max(128, tile_m // 2), 128})
        # least padded rows wins; ties prefer the larger tile
        tm = min(candidates, key=lambda t: (_round_up(M, t) - M, -t))
    M_pad = _round_up(M, tm)

    x2 = x.reshape(M, D)
    if M_pad != M:
        x2 = jnp.pad(x2, ((0, M_pad - M), (0, 0)))   # padded rows sliced off below

    # --- one-time wrapper-side layout plumbing (store weights this way IRL) ---
    R = params["gate_proj"][1].shape[1]
    R_pad = _round_up(R, 128)                         # lane-dense LoRA intermediate

    def prep(name):
        w, a, b, bias = params[name]
        wt = w.T                                      # (D_in, D_out) = W^T
        bt = b.T                                      # (D_in, R)     = B^T
        at = a.T                                      # (R, D_out)    = A^T
        if R_pad != R:
            bt = jnp.pad(bt, ((0, 0), (0, R_pad - R)))
            at = jnp.pad(at, ((0, R_pad - R), (0, 0)))
        # For real models: cast wt/bt/at (and x) to bf16 here; accumulation in
        # the kernel stays f32 via preferred_element_type.
        return wt, bt, at, bias.reshape(1, D)

    wg, bg, ag, biasg = prep("gate_proj")
    wd, bd, ad, biasd = prep("down_proj")
    wu, bu, au, biasu = prep("up_proj")

    wbytes = jnp.dtype(wg.dtype).itemsize
    xbytes = jnp.dtype(x.dtype).itemsize
    cost = pl.CostEstimate(
        flops=3 * 2 * M_pad * D * (D + 2 * R_pad),
        transcendentals=0,
        bytes_accessed=3 * (D * D + 2 * D * R_pad + D) * wbytes
        + 2 * M_pad * D * xbytes,
    )

    out = pl.pallas_call(
        lora_mlp_kernel,
        out_shape=jax.ShapeDtypeStruct((M_pad, D), x.dtype),
        grid_spec=pltpu.PrefetchScalarGridSpec(
            num_scalar_prefetch=0,
            grid=(M_pad // tm,),
            in_specs=[
                pl.BlockSpec((tm, D), lambda i: (i, 0)),                   # x rows
                _const_spec((D, D)), _const_spec((D, R_pad)),
                _const_spec((R_pad, D)), _const_spec((1, D)),              # gate
                _const_spec((D, D)), _const_spec((D, R_pad)),
                _const_spec((R_pad, D)), _const_spec((1, D)),              # down
                _const_spec((D, D)), _const_spec((D, R_pad)),
                _const_spec((R_pad, D)), _const_spec((1, D)),              # up
            ],
            out_specs=pl.BlockSpec((tm, D), lambda i: (i, 0)),             # lane-dense
        ),
        compiler_params=pltpu.CompilerParams(
            dimension_semantics=("parallel",),     # megacore-shards the row grid
            vmem_limit_bytes=_vmem_limit_bytes(),  # ~75% of physical VMEM per TC
        ),
        cost_estimate=cost,
    )(x2,
      wg, bg, ag, biasg,
      wd, bd, ad, biasd,
      wu, bu, au, biasu)

    if M_pad != M:
        out = out[:M]
    return out.reshape(batch, seq, D)


def _reference(x, params):
    """Pure-JAX reference matching the PyTorch forward exactly (dense A@B + W)."""
    h = x.astype(jnp.float32)
    for name in ("gate_proj", "down_proj", "up_proj"):
        w, a, b, bias = params[name]
        adapted = a.astype(jnp.float32) @ b.astype(jnp.float32) + w.astype(jnp.float32)
        h = h @ adapted.T + bias.astype(jnp.float32)
    return h


def make_params(key, D, R, dtype=jnp.float32):
    params = {}
    for i, name in enumerate(("gate_proj", "down_proj", "up_proj")):
        k = jax.random.fold_in(key, i)
        kw, ka, kb, kbias = jax.random.split(k, 4)
        w = (jax.random.normal(kw, (D, D)) * 0.05).astype(dtype)      # nn.Linear.weight (out,in)
        a = (jax.random.normal(ka, (D, R)) * 0.05).astype(dtype)      # LoRA A
        b = (jax.random.normal(kb, (R, D)) * 0.05).astype(dtype)      # LoRA B
        bias = (jax.random.normal(kbias, (D,)) * 0.05).astype(dtype)  # nn.Linear.bias
        params[name] = (w, a, b, bias)
    return params


if __name__ == "__main__":
    key = jax.random.PRNGKey(0)
    batch, seq, D, R = 2, 8, 32, 4

    kx, kp = jax.random.split(key)
    x = jax.random.normal(kx, (batch, seq, D), dtype=jnp.float32)
    params = make_params(kp, D, R)

    out = lora_mlp_forward(x, params)
    out = jax.block_until_ready(out)

    ref = _reference(x.reshape(-1, D), params).reshape(batch, seq, D)
    # Tolerance looser than 1e-5 because (a) the kernel uses the re-associated
    # low-rank form x@W^T + (x@B^T)@A^T and (b) TPU default matmul precision
    # rounds f32 operands; both change float summation order vs. the reference.
    np.testing.assert_allclose(np.asarray(out), np.asarray(ref),
                               rtol=2e-2, atol=2e-2)
    print("KERNEL_OK")
</pallas_src>

<mosaic_0001>
module attributes {stable_mosaic.version = 11 : i64} {
  func.func @lora_mlp_kernel(%arg0: i32, %arg1: memref<16x32xf32, #tpu.memory_space<vmem>>, %arg2: memref<32x32xf32, #tpu.memory_space<vmem>>, %arg3: memref<32x128xf32, #tpu.memory_space<vmem>>, %arg4: memref<128x32xf32, #tpu.memory_space<vmem>>, %arg5: memref<1x32xf32, #tpu.memory_space<vmem>>, %arg6: memref<32x32xf32, #tpu.memory_space<vmem>>, %arg7: memref<32x128xf32, #tpu.memory_space<vmem>>, %arg8: memref<128x32xf32, #tpu.memory_space<vmem>>, %arg9: memref<1x32xf32, #tpu.memory_space<vmem>>, %arg10: memref<32x32xf32, #tpu.memory_space<vmem>>, %arg11: memref<32x128xf32, #tpu.memory_space<vmem>>, %arg12: memref<128x32xf32, #tpu.memory_space<vmem>>, %arg13: memref<1x32xf32, #tpu.memory_space<vmem>>, %arg14: memref<16x32xf32, #tpu.memory_space<vmem>>) attributes {dimension_semantics = [#tpu.dimension_semantics<parallel>], iteration_bounds = array<i64: 1>, scalar_prefetch = 0 : i64, scratch_operands = 0 : i64, tpu.core_type = #tpu.core_type<tc>, window_params = [{transform_indices = @transform_0, window_bounds = array<i64: 16, 32>}, {pipeline_mode = #tpu.pipeline_mode<synchronous>, transform_indices = @transform_1, window_bounds = array<i64: 32, 32>}, {pipeline_mode = #tpu.pipeline_mode<synchronous>, transform_indices = @transform_2, window_bounds = array<i64: 32, 128>}, {pipeline_mode = #tpu.pipeline_mode<synchronous>, transform_indices = @transform_3, window_bounds = array<i64: 128, 32>}, {pipeline_mode = #tpu.pipeline_mode<synchronous>, transform_indices = @transform_4, window_bounds = array<i64: 1, 32>}, {pipeline_mode = #tpu.pipeline_mode<synchronous>, transform_indices = @transform_5, window_bounds = array<i64: 32, 32>}, {pipeline_mode = #tpu.pipeline_mode<synchronous>, transform_indices = @transform_6, window_bounds = array<i64: 32, 128>}, {pipeline_mode = #tpu.pipeline_mode<synchronous>, transform_indices = @transform_7, window_bounds = array<i64: 128, 32>}, {pipeline_mode = #tpu.pipeline_mode<synchronous>, transform_indices = @transform_8, window_bounds = array<i64: 1, 32>}, {pipeline_mode = #tpu.pipeline_mode<synchronous>, transform_indices = @transform_9, window_bounds = array<i64: 32, 32>}, {pipeline_mode = #tpu.pipeline_mode<synchronous>, transform_indices = @transform_10, window_bounds = array<i64: 32, 128>}, {pipeline_mode = #tpu.pipeline_mode<synchronous>, transform_indices = @transform_11, window_bounds = array<i64: 128, 32>}, {pipeline_mode = #tpu.pipeline_mode<synchronous>, transform_indices = @transform_12, window_bounds = array<i64: 1, 32>}, {transform_indices = @transform_13, window_bounds = array<i64: 16, 32>}]} {
    %c0 = arith.constant 0 : index
    %c0_0 = arith.constant 0 : index
    %0 = vector.load %arg1[%c0, %c0_0] : memref<16x32xf32, #tpu.memory_space<vmem>>, vector<16x32xf32>
    %c0_1 = arith.constant 0 : index
    %c0_2 = arith.constant 0 : index
    %1 = vector.load %arg2[%c0_1, %c0_2] : memref<32x32xf32, #tpu.memory_space<vmem>>, vector<32x32xf32>
    %cst = arith.constant dense<0.000000e+00> : vector<16x32xf32>
    %2 = tpu.matmul %0, %1, %cst {dimension_numbers = #tpu.dot_dimension_numbers<[1], [0], [0], [1], [0, 0, 1, 1], [], []>} : vector<16x32xf32>, vector<32x32xf32>, vector<16x32xf32> -> vector<16x32xf32>
    %c0_3 = arith.constant 0 : index
    %c0_4 = arith.constant 0 : index
    %3 = vector.load %arg3[%c0_3, %c0_4] : memref<32x128xf32, #tpu.memory_space<vmem>>, vector<32x128xf32>
    %cst_5 = arith.constant dense<0.000000e+00> : vector<16x128xf32>
    %4 = tpu.matmul %0, %3, %cst_5 {dimension_numbers = #tpu.dot_dimension_numbers<[1], [0], [0], [1], [0, 0, 1, 1], [], []>} : vector<16x32xf32>, vector<32x128xf32>, vector<16x128xf32> -> vector<16x128xf32>
    %c0_6 = arith.constant 0 : index
    %c0_7 = arith.constant 0 : index
    %5 = vector.load %arg4[%c0_6, %c0_7] : memref<128x32xf32, #tpu.memory_space<vmem>>, vector<128x32xf32>
    %cst_8 = arith.constant dense<0.000000e+00> : vector<16x32xf32>
    %6 = tpu.matmul %4, %5, %cst_8 {dimension_numbers = #tpu.dot_dimension_numbers<[1], [0], [0], [1], [0, 0, 1, 1], [], []>} : vector<16x128xf32>, vector<128x32xf32>, vector<16x32xf32> -> vector<16x32xf32>
    %7 = arith.addf %2, %6 : vector<16x32xf32>
    %c0_9 = arith.constant 0 : index
    %c0_10 = arith.constant 0 : index
    %8 = vector.load %arg5[%c0_9, %c0_10] : memref<1x32xf32, #tpu.memory_space<vmem>>, vector<1x32xf32>
    %9 = vector.broadcast %8 : vector<1x32xf32> to vector<16x32xf32>
    %10 = arith.addf %7, %9 : vector<16x32xf32>
    %c0_11 = arith.constant 0 : index
    %c0_12 = arith.constant 0 : index
    %11 = vector.load %arg6[%c0_11, %c0_12] : memref<32x32xf32, #tpu.memory_space<vmem>>, vector<32x32xf32>
    %cst_13 = arith.constant dense<0.000000e+00> : vector<16x32xf32>
    %12 = tpu.matmul %10, %11, %cst_13 {dimension_numbers = #tpu.dot_dimension_numbers<[1], [0], [0], [1], [0, 0, 1, 1], [], []>} : vector<16x32xf32>, vector<32x32xf32>, vector<16x32xf32> -> vector<16x32xf32>
    %c0_14 = arith.constant 0 : index
    %c0_15 = arith.constant 0 : index
    %13 = vector.load %arg7[%c0_14, %c0_15] : memref<32x128xf32, #tpu.memory_space<vmem>>, vector<32x128xf32>
    %cst_16 = arith.constant dense<0.000000e+00> : vector<16x128xf32>
    %14 = tpu.matmul %10, %13, %cst_16 {dimension_numbers = #tpu.dot_dimension_numbers<[1], [0], [0], [1], [0, 0, 1, 1], [], []>} : vector<16x32xf32>, vector<32x128xf32>, vector<16x128xf32> -> vector<16x128xf32>
    %c0_17 = arith.constant 0 : index
    %c0_18 = arith.constant 0 : index
    %15 = vector.load %arg8[%c0_17, %c0_18] : memref<128x32xf32, #tpu.memory_space<vmem>>, vector<128x32xf32>
    %cst_19 = arith.constant dense<0.000000e+00> : vector<16x32xf32>
    %16 = tpu.matmul %14, %15, %cst_19 {dimension_numbers = #tpu.dot_dimension_numbers<[1], [0], [0], [1], [0, 0, 1, 1], [], []>} : vector<16x128xf32>, vector<128x32xf32>, vector<16x32xf32> -> vector<16x32xf32>
    %17 = arith.addf %12, %16 : vector<16x32xf32>
    %c0_20 = arith.constant 0 : index
    %c0_21 = arith.constant 0 : index
    %18 = vector.load %arg9[%c0_20, %c0_21] : memref<1x32xf32, #tpu.memory_space<vmem>>, vector<1x32xf32>
    %19 = vector.broadcast %18 : vector<1x32xf32> to vector<16x32xf32>
    %20 = arith.addf %17, %19 : vector<16x32xf32>
    %c0_22 = arith.constant 0 : index
    %c0_23 = arith.constant 0 : index
    %21 = vector.load %arg10[%c0_22, %c0_23] : memref<32x32xf32, #tpu.memory_space<vmem>>, vector<32x32xf32>
    %cst_24 = arith.constant dense<0.000000e+00> : vector<16x32xf32>
    %22 = tpu.matmul %20, %21, %cst_24 {dimension_numbers = #tpu.dot_dimension_numbers<[1], [0], [0], [1], [0, 0, 1, 1], [], []>} : vector<16x32xf32>, vector<32x32xf32>, vector<16x32xf32> -> vector<16x32xf32>
    %c0_25 = arith.constant 0 : index
    %c0_26 = arith.constant 0 : index
    %23 = vector.load %arg11[%c0_25, %c0_26] : memref<32x128xf32, #tpu.memory_space<vmem>>, vector<32x128xf32>
    %cst_27 = arith.constant dense<0.000000e+00> : vector<16x128xf32>
    %24 = tpu.matmul %20, %23, %cst_27 {dimension_numbers = #tpu.dot_dimension_numbers<[1], [0], [0], [1], [0, 0, 1, 1], [], []>} : vector<16x32xf32>, vector<32x128xf32>, vector<16x128xf32> -> vector<16x128xf32>
    %c0_28 = arith.constant 0 : index
    %c0_29 = arith.constant 0 : index
    %25 = vector.load %arg12[%c0_28, %c0_29] : memref<128x32xf32, #tpu.memory_space<vmem>>, vector<128x32xf32>
    %cst_30 = arith.constant dense<0.000000e+00> : vector<16x32xf32>
    %26 = tpu.matmul %24, %25, %cst_30 {dimension_numbers = #tpu.dot_dimension_numbers<[1], [0], [0], [1], [0, 0, 1, 1], [], []>} : vector<16x128xf32>, vector<128x32xf32>, vector<16x32xf32> -> vector<16x32xf32>
    %27 = arith.addf %22, %26 : vector<16x32xf32>
    %c0_31 = arith.constant 0 : index
    %c0_32 = arith.constant 0 : index
    %28 = vector.load %arg13[%c0_31, %c0_32] : memref<1x32xf32, #tpu.memory_space<vmem>>, vector<1x32xf32>
    %29 = vector.broadcast %28 : vector<1x32xf32> to vector<16x32xf32>
    %30 = arith.addf %27, %29 : vector<16x32xf32>
    %c0_33 = arith.constant 0 : index
    %c0_34 = arith.constant 0 : index
    %31 = vector.load %arg14[%c0_33, %c0_34] : memref<16x32xf32, #tpu.memory_space<vmem>>, vector<16x32xf32>
    tpu.vector_store %arg14[%c0_33, %c0_34], %30 {strides = array<i32>} : memref<16x32xf32, #tpu.memory_space<vmem>>, vector<16x32xf32>,
    return
  }
  func.func @transform_0(%arg0: i32) -> (i32, i32) {
    %c0_i32 = arith.constant 0 : i32
    %c0_i32_0 = arith.constant 0 : i32
    return %arg0, %c0_i32 : i32, i32
  }
  func.func @transform_1(%arg0: i32) -> (i32, i32) {
    %c0_i32 = arith.constant 0 : i32
    %c0_i32_0 = arith.constant 0 : i32
    %c0_i32_1 = arith.constant 0 : i32
    return %c0_i32, %c0_i32_0 : i32, i32
  }
  func.func @transform_2(%arg0: i32) -> (i32, i32) {
    %c0_i32 = arith.constant 0 : i32
    %c0_i32_0 = arith.constant 0 : i32
    %c0_i32_1 = arith.constant 0 : i32
    return %c0_i32, %c0_i32_0 : i32, i32
  }
  func.func @transform_3(%arg0: i32) -> (i32, i32) {
    %c0_i32 = arith.constant 0 : i32
    %c0_i32_0 = arith.constant 0 : i32
    %c0_i32_1 = arith.constant 0 : i32
    return %c0_i32, %c0_i32_0 : i32, i32
  }
  func.func @transform_4(%arg0: i32) -> (i32, i32) {
    %c0_i32 = arith.constant 0 : i32
    %c0_i32_0 = arith.constant 0 : i32
    %c0_i32_1 = arith.constant 0 : i32
    return %c0_i32, %c0_i32_0 : i32, i32
  }
  func.func @transform_5(%arg0: i32) -> (i32, i32) {
    %c0_i32 = arith.constant 0 : i32
    %c0_i32_0 = arith.constant 0 : i32
    %c0_i32_1 = arith.constant 0 : i32
    return %c0_i32, %c0_i32_0 : i32, i32
  }
  func.func @transform_6(%arg0: i32) -> (i32, i32) {
    %c0_i32 = arith.constant 0 : i32
    %c0_i32_0 = arith.constant 0 : i32
    %c0_i32_1 = arith.constant 0 : i32
    return %c0_i32, %c0_i32_0 : i32, i32
  }
  func.func @transform_7(%arg0: i32) -> (i32, i32) {
    %c0_i32 = arith.constant 0 : i32
    %c0_i32_0 = arith.constant 0 : i32
    %c0_i32_1 = arith.constant 0 : i32
    return %c0_i32, %c0_i32_0 : i32, i32
  }
  func.func @transform_8(%arg0: i32) -> (i32, i32) {
    %c0_i32 = arith.constant 0 : i32
    %c0_i32_0 = arith.constant 0 : i32
    %c0_i32_1 = arith.constant 0 : i32
    return %c0_i32, %c0_i32_0 : i32, i32
  }
  func.func @transform_9(%arg0: i32) -> (i32, i32) {
    %c0_i32 = arith.constant 0 : i32
    %c0_i32_0 = arith.constant 0 : i32
    %c0_i32_1 = arith.constant 0 : i32
    return %c0_i32, %c0_i32_0 : i32, i32
  }
  func.func @transform_10(%arg0: i32) -> (i32, i32) {
    %c0_i32 = arith.constant 0 : i32
    %c0_i32_0 = arith.constant 0 : i32
    %c0_i32_1 = arith.constant 0 : i32
    return %c0_i32, %c0_i32_0 : i32, i32
  }
  func.func @transform_11(%arg0: i32) -> (i32, i32) {
    %c0_i32 = arith.constant 0 : i32
    %c0_i32_0 = arith.constant 0 : i32
    %c0_i32_1 = arith.constant 0 : i32
    return %c0_i32, %c0_i32_0 : i32, i32
  }
  func.func @transform_12(%arg0: i32) -> (i32, i32) {
    %c0_i32 = arith.constant 0 : i32
    %c0_i32_0 = arith.constant 0 : i32
    %c0_i32_1 = arith.constant 0 : i32
    return %c0_i32, %c0_i32_0 : i32, i32
  }
  func.func @transform_13(%arg0: i32) -> (i32, i32) {
    %c0_i32 = arith.constant 0 : i32
    %c0_i32_0 = arith.constant 0 : i32
    return %arg0, %c0_i32 : i32, i32
  }
}

</mosaic_0001>

<llo_original>
// kernel: lora_mlp_forward.1
$region0: #{lora_mlp_forward.1}
  #allocation0 [shape = 'u32[]', space=smem, size = 0x4, offset = 0x4, fixed_abs, tag = 'smem constant byte address 0x4 - core index']
  #allocation1 [shape = 'u32[72,128]{1,0:T(1,128)}', space=vmem, size = 0x9000, scoped, tag = 'internal scratch']
  %s0 = inlined_call_operand.vmem [shape: f32[16,32], index: 0, kind: input, shape index: {}]
  %s1 = inlined_call_operand.vmem [shape: f32[32,32], index: 1, kind: input, shape index: {}]
  %s2 = inlined_call_operand.vmem [shape: f32[32,128], index: 2, kind: input, shape index: {}]
  %s3 = inlined_call_operand.vmem [shape: f32[128,32], index: 3, kind: input, shape index: {}]
  %s4 = inlined_call_operand.vmem [shape: f32[1,32], index: 4, kind: input, shape index: {}]
  %s5 = inlined_call_operand.vmem [shape: f32[32,32], index: 5, kind: input, shape index: {}]
  %s6 = inlined_call_operand.vmem [shape: f32[32,128], index: 6, kind: input, shape index: {}]
  %s7 = inlined_call_operand.vmem [shape: f32[128,32], index: 7, kind: input, shape index: {}]
  %s8 = inlined_call_operand.vmem [shape: f32[1,32], index: 8, kind: input, shape index: {}]
  %s9 = inlined_call_operand.vmem [shape: f32[32,32], index: 9, kind: input, shape index: {}]
  %s10 = inlined_call_operand.vmem [shape: f32[32,128], index: 10, kind: input, shape index: {}]
  %s11 = inlined_call_operand.vmem [shape: f32[128,32], index: 11, kind: input, shape index: {}]
  %s12 = inlined_call_operand.vmem [shape: f32[1,32], index: 12, kind: input, shape index: {}]
  %s13 = inlined_call_operand.hbm [shape: f32[16,32], index: 13, kind: output, shape index: {}]
  %s14 = sld [smem:[#allocation0]]
  $region62: #{lora_mlp_forward.1} parent=0
    _
  %s16 = ssub.s32 1, %s14
  %s17 = scalar_select 0, %s16, %s14
  $region1: #{lora_mlp_forward.1} parent=0
    #allocation2 [shape = 'u8[8192]{0}', space=vmem, size = 0x2000, scoped, tag = 'output window, operand 0, single buffered']
    #allocation3 [shape = 's32[1]{0}', space=sflag, size = 0x4, scoped, tag = 'scoped memory for lora_mlp_forward.1']
    %18 = vsyncpa [#allocation3], 0
    // Predicated region
    $region2: #{lora_mlp_forward.1} parent=1 // pred_check
      _
    $region3: #{lora_mlp_forward.1} parent=1 // pred_check_branch
      %20 = sbr.rel (0) target = $region5
    $region4: #{lora_mlp_forward.1} parent=1 // pred_region
      _
    $region5: #{lora_mlp_forward.1} parent=1 // pred_fallthru
      _
    // Predicated region
    $region6: #{lora_mlp_forward.1} parent=1 // pred_check
      _
    $region7: #{lora_mlp_forward.1} parent=1 // pred_check_branch
      %22 = sbr.rel (0) target = $region9
    $region8: #{lora_mlp_forward.1} parent=1 // pred_region
      _
    $region9: #{lora_mlp_forward.1} parent=1 // pred_fallthru
      _
    // Predicated region
    $region10: #{lora_mlp_forward.1} parent=1 // pred_check
      _
    $region11: #{lora_mlp_forward.1} parent=1 // pred_check_branch
      %24 = sbr.rel (0) target = $region13
    $region12: #{lora_mlp_forward.1} parent=1 // pred_region
      _
    $region13: #{lora_mlp_forward.1} parent=1 // pred_fallthru
      _
    // Predicated region
    $region14: #{lora_mlp_forward.1} parent=1 // pred_check
      _
    $region15: #{lora_mlp_forward.1} parent=1 // pred_check_branch
      %26 = sbr.rel (0) target = $region17
    $region16: #{lora_mlp_forward.1} parent=1 // pred_region
      _
    $region17: #{lora_mlp_forward.1} parent=1 // pred_fallthru
      _
    // Predicated region
    $region18: #{lora_mlp_forward.1} parent=1 // pred_check
      _
    $region19: #{lora_mlp_forward.1} parent=1 // pred_check_branch
      %28 = sbr.rel (0) target = $region21
    $region20: #{lora_mlp_forward.1} parent=1 // pred_region
      _
    $region21: #{lora_mlp_forward.1} parent=1 // pred_fallthru
      _
    // Predicated region
    $region22: #{lora_mlp_forward.1} parent=1 // pred_check
      _
    $region23: #{lora_mlp_forward.1} parent=1 // pred_check_branch
      %30 = sbr.rel (0) target = $region25
    $region24: #{lora_mlp_forward.1} parent=1 // pred_region
      _
    $region25: #{lora_mlp_forward.1} parent=1 // pred_fallthru
      _
    // Predicated region
    $region26: #{lora_mlp_forward.1} parent=1 // pred_check
      _
    $region27: #{lora_mlp_forward.1} parent=1 // pred_check_branch
      %32 = sbr.rel (0) target = $region29
    $region28: #{lora_mlp_forward.1} parent=1 // pred_region
      _
    $region29: #{lora_mlp_forward.1} parent=1 // pred_fallthru
      _
    // Predicated region
    $region30: #{lora_mlp_forward.1} parent=1 // pred_check
      _
    $region31: #{lora_mlp_forward.1} parent=1 // pred_check_branch
      %34 = sbr.rel (0) target = $region33
    $region32: #{lora_mlp_forward.1} parent=1 // pred_region
      _
    $region33: #{lora_mlp_forward.1} parent=1 // pred_fallthru
      _
    // Predicated region
    $region34: #{lora_mlp_forward.1} parent=1 // pred_check
      _
    $region35: #{lora_mlp_forward.1} parent=1 // pred_check_branch
      %36 = sbr.rel (0) target = $region37
    $region36: #{lora_mlp_forward.1} parent=1 // pred_region
      _
    $region37: #{lora_mlp_forward.1} parent=1 // pred_fallthru
      _
    // Predicated region
    $region38: #{lora_mlp_forward.1} parent=1 // pred_check
      _
    $region39: #{lora_mlp_forward.1} parent=1 // pred_check_branch
      %38 = sbr.rel (0) target = $region41
    $region40: #{lora_mlp_forward.1} parent=1 // pred_region
      _
    $region41: #{lora_mlp_forward.1} parent=1 // pred_fallthru
      _
    // Predicated region
    $region42: #{lora_mlp_forward.1} parent=1 // pred_check
      _
    $region43: #{lora_mlp_forward.1} parent=1 // pred_check_branch
      %40 = sbr.rel (0) target = $region45
    $region44: #{lora_mlp_forward.1} parent=1 // pred_region
      _
    $region45: #{lora_mlp_forward.1} parent=1 // pred_fallthru
      _
    // Predicated region
    $region46: #{lora_mlp_forward.1} parent=1 // pred_check
      _
    $region47: #{lora_mlp_forward.1} parent=1 // pred_check_branch
      %42 = sbr.rel (0) target = $region49
    $region48: #{lora_mlp_forward.1} parent=1 // pred_region
      _
    $region49: #{lora_mlp_forward.1} parent=1 // pred_fallthru
      _
    // Predicated region
    $region50: #{lora_mlp_forward.1} parent=1 // pred_check
      _
    $region51: #{lora_mlp_forward.1} parent=1 // pred_check_branch
      %44 = sbr.rel (0) target = $region53
    $region52: #{lora_mlp_forward.1} parent=1 // pred_region
      _
    $region53: #{lora_mlp_forward.1} parent=1 // pred_fallthru
      _
    %v45 = vld [vmem:[%s0] sm:$0xff]
    %v46 = vld [vmem:[%s0 + $0x8] sm:$0xff]
    %v47 = vld [vmem:[%s1] sm:$0xff]
    %v48 = vld [vmem:[%s1 + $0x8] sm:$0xff]
    %v49 = vld [vmem:[%s1 + $0x10] sm:$0xff]
    %v50 = vld [vmem:[%s1 + $0x18] sm:$0xff]
    %v51 = vld [vmem:[%s2] sm:$0xff]
    %v52 = vld [vmem:[%s2 + $0x8] sm:$0xff]
    %v53 = vld [vmem:[%s2 + $0x10] sm:$0xff]
    %v54 = vld [vmem:[%s2 + $0x18] sm:$0xff]
    %vm55 = vcmask 261120
    %v57 = vsel %vm55, %v45, 0
    %v60 = vsel %vm55, %v46, 0
    %62 = vmatpush.msra.mxu0 0.0
    %63 = vmatpush.msra.mxu0 0.0
    %64 = vmatpush.msra.mxu0 0.0
    %65 = vmatpush.msra.mxu0 0.0
    %66 = vmatpush.msra.mxu0 0.0
    %67 = vmatpush.msra.mxu0 0.0
    %68 = vmatpush.msra.mxu0 0.0
    %69 = vmatpush.msra.mxu0 0.0
    %70 = vmatpush.msra.mxu0 0.0
    %71 = vmatpush.msra.mxu0 0.0
    %72 = vmatpush.msra.mxu0 0.0
    %73 = vmatpush.msra.mxu0 0.0
    %74 = vmatpush.msra.mxu0 %v54
    %75 = vmatpush.msra.mxu0 %v53
    %76 = vmatpush.msra.mxu0 %v52
    %77 = vmatpush.msra.mxu0 %v51
    %78 = vmatmul.f32.gmra.mxu0 %v57
    %v79 = vpop.f32.mrf.mxu0
    %v80 = vadd.f32 0.0, %v79
    %81 = vmatmul.f32.gmra.mxu0 %v60
    %v82 = vpop.f32.mrf.mxu0
    %v83 = vadd.f32 0.0, %v82
    %84 = vdwg.mxu0
    %v85 = vld [vmem:[%s3] sm:$0xff]
    %v86 = vld [vmem:[%s3 + $0x8] sm:$0xff]
    %v87 = vld [vmem:[%s3 + $0x10] sm:$0xff]
    %v88 = vld [vmem:[%s3 + $0x18] sm:$0xff]
    %v89 = vld [vmem:[%s3 + $0x20] sm:$0xff]
    %v90 = vld [vmem:[%s3 + $0x28] sm:$0xff]
    %v91 = vld [vmem:[%s3 + $0x30] sm:$0xff]
    %v92 = vld [vmem:[%s3 + $0x38] sm:$0xff]
    %v93 = vld [vmem:[%s3 + $0x40] sm:$0xff]
    %v94 = vld [vmem:[%s3 + $0x48] sm:$0xff]
    %v95 = vld [vmem:[%s3 + $0x50] sm:$0xff]
    %v96 = vld [vmem:[%s3 + $0x58] sm:$0xff]
    %v97 = vld [vmem:[%s3 + $0x60] sm:$0xff]
    %v98 = vld [vmem:[%s3 + $0x68] sm:$0xff]
    %v99 = vld [vmem:[%s3 + $0x70] sm:$0xff]
    %v100 = vld [vmem:[%s3 + $0x78] sm:$0xff]
    %101 = vmatpush.msra.mxu0 %v100
    %102 = vmatpush.msra.mxu0 %v99
    %103 = vmatpush.msra.mxu0 %v98
    %104 = vmatpush.msra.mxu0 %v97
    %105 = vmatpush.msra.mxu0 %v96
    %106 = vmatpush.msra.mxu0 %v95
    %107 = vmatpush.msra.mxu0 %v94
    %108 = vmatpush.msra.mxu0 %v93
    %109 = vmatpush.msra.mxu0 %v92
    %110 = vmatpush.msra.mxu0 %v91
    %111 = vmatpush.msra.mxu0 %v90
    %112 = vmatpush.msra.mxu0 %v89
    %113 = vmatpush.msra.mxu0 %v88
    %114 = vmatpush.msra.mxu0 %v87
    %115 = vmatpush.msra.mxu0 %v86
    %116 = vmatpush.msra.mxu0 %v85
    %117 = vmatmul.f32.gmra.mxu0 %v80
    %v118 = vpop.f32.mrf.mxu0
    %v119 = vadd.f32 0.0, %v118
    %120 = vmatmul.f32.gmra.mxu0 %v83
    %v121 = vpop.f32.mrf.mxu0
    %v122 = vadd.f32 0.0, %v121
    %123 = vdwg.mxu0
    %124 = vmatpush.msra.mxu0 0.0
    %125 = vmatpush.msra.mxu0 0.0
    %126 = vmatpush.msra.mxu0 0.0
    %127 = vmatpush.msra.mxu0 0.0
    %128 = vmatpush.msra.mxu0 0.0
    %129 = vmatpush.msra.mxu0 0.0
    %130 = vmatpush.msra.mxu0 0.0
    %131 = vmatpush.msra.mxu0 0.0
    %132 = vmatpush.msra.mxu0 0.0
    %133 = vmatpush.msra.mxu0 0.0
    %134 = vmatpush.msra.mxu0 0.0
    %135 = vmatpush.msra.mxu0 0.0
    %136 = vmatpush.msra.mxu0 %v50
    %137 = vmatpush.msra.mxu0 %v49
    %138 = vmatpush.msra.mxu0 %v48
    %139 = vmatpush.msra.mxu0 %v47
    %140 = vmatmul.f32.gmra.mxu0 %v57
    %v141 = vpop.f32.mrf.mxu0
    %v142 = vadd.f32 %v119, %v141
    %143 = vmatmul.f32.gmra.mxu0 %v60
    %v144 = vpop.f32.mrf.mxu0
    %v145 = vadd.f32 %v122, %v144
    %146 = vdwg.mxu0
    %v147 = vld [vmem:[%s4] sm:$0x1]
    %v149 = vperm.slane %v147, 0
    %v151 = vadd.f32 %v142, %v149
    %v152 = vadd.f32 %v145, %v149
    %v153 = vld [vmem:[%s5] sm:$0xff]
    %v154 = vld [vmem:[%s5 + $0x8] sm:$0xff]
    %v155 = vld [vmem:[%s5 + $0x10] sm:$0xff]
    %v156 = vld [vmem:[%s5 + $0x18] sm:$0xff]
    %v157 = vld [vmem:[%s6] sm:$0xff]
    %v158 = vld [vmem:[%s6 + $0x8] sm:$0xff]
    %v159 = vld [vmem:[%s6 + $0x10] sm:$0xff]
    %v160 = vld [vmem:[%s6 + $0x18] sm:$0xff]
    %v162 = vsel %vm55, %v151, 0
    %v165 = vsel %vm55, %v152, 0
    %167 = vmatpush.msra.mxu0 0.0
    %168 = vmatpush.msra.mxu0 0.0
    %169 = vmatpush.msra.mxu0 0.0
    %170 = vmatpush.msra.mxu0 0.0
    %171 = vmatpush.msra.mxu0 0.0
    %172 = vmatpush.msra.mxu0 0.0
    %173 = vmatpush.msra.mxu0 0.0
    %174 = vmatpush.msra.mxu0 0.0
    %175 = vmatpush.msra.mxu0 0.0
    %176 = vmatpush.msra.mxu0 0.0
    %177 = vmatpush.msra.mxu0 0.0
    %178 = vmatpush.msra.mxu0 0.0
    %179 = vmatpush.msra.mxu0 %v160
    %180 = vmatpush.msra.mxu0 %v159
    %181 = vmatpush.msra.mxu0 %v158
    %182 = vmatpush.msra.mxu0 %v157
    %183 = vmatmul.f32.gmra.mxu0 %v162
    %v184 = vpop.f32.mrf.mxu0
    %v185 = vadd.f32 0.0, %v184
    %186 = vmatmul.f32.gmra.mxu0 %v165
    %v187 = vpop.f32.mrf.mxu0
    %v188 = vadd.f32 0.0, %v187
    %189 = vdwg.mxu0
    %v190 = vld [vmem:[%s7] sm:$0xff]
    %v191 = vld [vmem:[%s7 + $0x8] sm:$0xff]
    %v192 = vld [vmem:[%s7 + $0x10] sm:$0xff]
    %v193 = vld [vmem:[%s7 + $0x18] sm:$0xff]
    %v194 = vld [vmem:[%s7 + $0x20] sm:$0xff]
    %v195 = vld [vmem:[%s7 + $0x28] sm:$0xff]
    %v196 = vld [vmem:[%s7 + $0x30] sm:$0xff]
    %v197 = vld [vmem:[%s7 + $0x38] sm:$0xff]
    %v198 = vld [vmem:[%s7 + $0x40] sm:$0xff]
    %v199 = vld [vmem:[%s7 + $0x48] sm:$0xff]
    %v200 = vld [vmem:[%s7 + $0x50] sm:$0xff]
    %v201 = vld [vmem:[%s7 + $0x58] sm:$0xff]
    %v202 = vld [vmem:[%s7 + $0x60] sm:$0xff]
    %v203 = vld [vmem:[%s7 + $0x68] sm:$0xff]
    %v204 = vld [vmem:[%s7 + $0x70] sm:$0xff]
    %v205 = vld [vmem:[%s7 + $0x78] sm:$0xff]
    %206 = vmatpush.msra.mxu0 %v205
    %207 = vmatpush.msra.mxu0 %v204
    %208 = vmatpush.msra.mxu0 %v203
    %209 = vmatpush.msra.mxu0 %v202
    %210 = vmatpush.msra.mxu0 %v201
    %211 = vmatpush.msra.mxu0 %v200
    %212 = vmatpush.msra.mxu0 %v199
    %213 = vmatpush.msra.mxu0 %v198
    %214 = vmatpush.msra.mxu0 %v197
    %215 = vmatpush.msra.mxu0 %v196
    %216 = vmatpush.msra.mxu0 %v195
    %217 = vmatpush.msra.mxu0 %v194
    %218 = vmatpush.msra.mxu0 %v193
    %219 = vmatpush.msra.mxu0 %v192
    %220 = vmatpush.msra.mxu0 %v191
    %221 = vmatpush.msra.mxu0 %v190
    %222 = vmatmul.f32.gmra.mxu0 %v185
    %v223 = vpop.f32.mrf.mxu0
    %v224 = vadd.f32 0.0, %v223
    %225 = vmatmul.f32.gmra.mxu0 %v188
    %v226 = vpop.f32.mrf.mxu0
    %v227 = vadd.f32 0.0, %v226
    %228 = vdwg.mxu0
    %229 = vmatpush.msra.mxu0 0.0
    %230 = vmatpush.msra.mxu0 0.0
    %231 = vmatpush.msra.mxu0 0.0
    %232 = vmatpush.msra.mxu0 0.0
    %233 = vmatpush.msra.mxu0 0.0
    %234 = vmatpush.msra.mxu0 0.0
    %235 = vmatpush.msra.mxu0 0.0
    %236 = vmatpush.msra.mxu0 0.0
    %237 = vmatpush.msra.mxu0 0.0
    %238 = vmatpush.msra.mxu0 0.0
    %239 = vmatpush.msra.mxu0 0.0
    %240 = vmatpush.msra.mxu0 0.0
    %241 = vmatpush.msra.mxu0 %v156
    %242 = vmatpush.msra.mxu0 %v155
    %243 = vmatpush.msra.mxu0 %v154
    %244 = vmatpush.msra.mxu0 %v153
    %245 = vmatmul.f32.gmra.mxu0 %v162
    %v246 = vpop.f32.mrf.mxu0
    %v247 = vadd.f32 %v224, %v246
    %248 = vmatmul.f32.gmra.mxu0 %v165
    %v249 = vpop.f32.mrf.mxu0
    %v250 = vadd.f32 %v227, %v249
    %251 = vdwg.mxu0
    %v252 = vld [vmem:[%s8] sm:$0x1]
    %v254 = vperm.slane %v252, 0
    %v256 = vadd.f32 %v247, %v254
    %v257 = vadd.f32 %v250, %v254
    %v258 = vld [vmem:[%s9] sm:$0xff]
    %v259 = vld [vmem:[%s9 + $0x8] sm:$0xff]
    %v260 = vld [vmem:[%s9 + $0x10] sm:$0xff]
    %v261 = vld [vmem:[%s9 + $0x18] sm:$0xff]
    %v262 = vld [vmem:[%s10] sm:$0xff]
    %v263 = vld [vmem:[%s10 + $0x8] sm:$0xff]
    %v264 = vld [vmem:[%s10 + $0x10] sm:$0xff]
    %v265 = vld [vmem:[%s10 + $0x18] sm:$0xff]
    %v267 = vsel %vm55, %v256, 0
    %v270 = vsel %vm55, %v257, 0
    %272 = vmatpush.msra.mxu0 0.0
    %273 = vmatpush.msra.mxu0 0.0
    %274 = vmatpush.msra.mxu0 0.0
    %275 = vmatpush.msra.mxu0 0.0
    %276 = vmatpush.msra.mxu0 0.0
    %277 = vmatpush.msra.mxu0 0.0
    %278 = vmatpush.msra.mxu0 0.0
    %279 = vmatpush.msra.mxu0 0.0
    %280 = vmatpush.msra.mxu0 0.0
    %281 = vmatpush.msra.mxu0 0.0
    %282 = vmatpush.msra.mxu0 0.0
    %283 = vmatpush.msra.mxu0 0.0
    %284 = vmatpush.msra.mxu0 %v265
    %285 = vmatpush.msra.mxu0 %v264
    %286 = vmatpush.msra.mxu0 %v263
    %287 = vmatpush.msra.mxu0 %v262
    %288 = vmatmul.f32.gmra.mxu0 %v267
    %v289 = vpop.f32.mrf.mxu0
    %v290 = vadd.f32 0.0, %v289
    %291 = vmatmul.f32.gmra.mxu0 %v270
    %v292 = vpop.f32.mrf.mxu0
    %v293 = vadd.f32 0.0, %v292
    %294 = vdwg.mxu0
    %v295 = vld [vmem:[%s11] sm:$0xff]
    %v296 = vld [vmem:[%s11 + $0x8] sm:$0xff]
    %v297 = vld [vmem:[%s11 + $0x10] sm:$0xff]
    %v298 = vld [vmem:[%s11 + $0x18] sm:$0xff]
    %v299 = vld [vmem:[%s11 + $0x20] sm:$0xff]
    %v300 = vld [vmem:[%s11 + $0x28] sm:$0xff]
    %v301 = vld [vmem:[%s11 + $0x30] sm:$0xff]
    %v302 = vld [vmem:[%s11 + $0x38] sm:$0xff]
    %v303 = vld [vmem:[%s11 + $0x40] sm:$0xff]
    %v304 = vld [vmem:[%s11 + $0x48] sm:$0xff]
    %v305 = vld [vmem:[%s11 + $0x50] sm:$0xff]
    %v306 = vld [vmem:[%s11 + $0x58] sm:$0xff]
    %v307 = vld [vmem:[%s11 + $0x60] sm:$0xff]
    %v308 = vld [vmem:[%s11 + $0x68] sm:$0xff]
    %v309 = vld [vmem:[%s11 + $0x70] sm:$0xff]
    %v310 = vld [vmem:[%s11 + $0x78] sm:$0xff]
    %311 = vmatpush.msra.mxu0 %v310
    %312 = vmatpush.msra.mxu0 %v309
    %313 = vmatpush.msra.mxu0 %v308
    %314 = vmatpush.msra.mxu0 %v307
    %315 = vmatpush.msra.mxu0 %v306
    %316 = vmatpush.msra.mxu0 %v305
    %317 = vmatpush.msra.mxu0 %v304
    %318 = vmatpush.msra.mxu0 %v303
    %319 = vmatpush.msra.mxu0 %v302
    %320 = vmatpush.msra.mxu0 %v301
    %321 = vmatpush.msra.mxu0 %v300
    %322 = vmatpush.msra.mxu0 %v299
    %323 = vmatpush.msra.mxu0 %v298
    %324 = vmatpush.msra.mxu0 %v297
    %325 = vmatpush.msra.mxu0 %v296
    %326 = vmatpush.msra.mxu0 %v295
    %327 = vmatmul.f32.gmra.mxu0 %v290
    %v328 = vpop.f32.mrf.mxu0
    %v329 = vadd.f32 0.0, %v328
    %330 = vmatmul.f32.gmra.mxu0 %v293
    %v331 = vpop.f32.mrf.mxu0
    %v332 = vadd.f32 0.0, %v331
    %333 = vdwg.mxu0
    %334 = vmatpush.msra.mxu0 0.0
    %335 = vmatpush.msra.mxu0 0.0
    %336 = vmatpush.msra.mxu0 0.0
    %337 = vmatpush.msra.mxu0 0.0
    %338 = vmatpush.msra.mxu0 0.0
    %339 = vmatpush.msra.mxu0 0.0
    %340 = vmatpush.msra.mxu0 0.0
    %341 = vmatpush.msra.mxu0 0.0
    %342 = vmatpush.msra.mxu0 0.0
    %343 = vmatpush.msra.mxu0 0.0
    %344 = vmatpush.msra.mxu0 0.0
    %345 = vmatpush.msra.mxu0 0.0
    %346 = vmatpush.msra.mxu0 %v261
    %347 = vmatpush.msra.mxu0 %v260
    %348 = vmatpush.msra.mxu0 %v259
    %349 = vmatpush.msra.mxu0 %v258
    %350 = vmatmul.f32.gmra.mxu0 %v267
    %v351 = vpop.f32.mrf.mxu0
    %v352 = vadd.f32 %v329, %v351
    %353 = vmatmul.f32.gmra.mxu0 %v270
    %v354 = vpop.f32.mrf.mxu0
    %v355 = vadd.f32 %v332, %v354
    %356 = vdwg.mxu0
    %v357 = vld [vmem:[%s12] sm:$0x1]
    %v359 = vperm.slane %v357, 0
    %v361 = vadd.f32 %v352, %v359
    %v362 = vadd.f32 %v355, %v359
    %363 = vst.msk [vmem:[#allocation2] sm:$0xff] %vm55, %v361
    %364 = vst.msk [vmem:[#allocation2 + $0x8] sm:$0xff] %vm55, %v362
    // Predicated region
    $region54: #{lora_mlp_forward.1} parent=1 // pred_check
      _
    $region55: #{lora_mlp_forward.1} parent=1 // pred_check_branch
      %366 = sbr.rel (0) target = $region57
    $region56: #{lora_mlp_forward.1} parent=1 // pred_region
      %368 = vsyncadd [#allocation3], 0
      %s369 = sshll.u32 [#allocation2], 4
      %s370 = int_to_ptr.vmem [resolvable:$true] %s369
      %s371 = sshll.u32 %s13, 4
      %s372 = int_to_ptr.hbm [resolvable:$true] %s371
      %377 = dma.vmem_to_hbm [thread:$0]  %s370, 256, %s372, [#allocation3], 128, 128, 8
    $region57: #{lora_mlp_forward.1} parent=1 // pred_fallthru
      _
    // Predicated region
    $region58: #{lora_mlp_forward.1} parent=1 // pred_check
      _
    $region59: #{lora_mlp_forward.1} parent=1 // pred_check_branch
      %379 = sbr.rel (0) target = $region61
    $region60: #{lora_mlp_forward.1} parent=1 // pred_region
      %381 = dma.done [#allocation3], 256
    $region61: #{lora_mlp_forward.1} parent=1 // pred_fallthru
      _
    %382 = vsyncpa [#allocation3], 1

</llo_original>
